<compile_context>
chip_gen: v7x
topology: tpu7x:2x2x1
jax: 0.10.0
libtpu: 0.0.40
codegen_flags: <defaults>
</compile_context>

<pallas_src>
import jax
import jax.numpy as jnp
import numpy as np
from jax.experimental import pallas as pl
from jax.experimental.pallas import tpu as pltpu


# ---------------------------------------------------------------------------
# Pallas kernel: one lane-dense bf16 matmul per tile, f32 accumulation.
# ---------------------------------------------------------------------------
def _fused_matmul_kernel(x_ref, w_ref, o_ref):
    # x_ref: (tn, K)  bf16   gathered [window | coarse | 1] rows
    # w_ref: (K,  M)  bf16   fused weight (constant index_map -> VMEM resident)
    # o_ref: (tn, M)  bf16
    o_ref[...] = jnp.dot(
        x_ref[...], w_ref[...], preferred_element_type=jnp.float32
    ).astype(o_ref.dtype)


def fused_rows_matmul(rows, w_fused, *, tile_n=1024, out_dtype=jnp.bfloat16):
    """rows: (N, K) bf16, w_fused: (K, M) bf16 -> (N, M) out_dtype."""
    n, k = rows.shape
    k2, m = w_fused.shape
    assert k == k2

    # Sublane-aligned row count.  Cap the tile so the "parallel" grid axis has
    # >= 2 steps whenever possible, so v7x megacore actually shards the work.
    n_aligned = max(16, pl.cdiv(n, 16) * 16)
    if n_aligned <= 2 * tile_n:
        tn = max(16, pl.cdiv(pl.cdiv(n_aligned, 2), 16) * 16)
    else:
        tn = tile_n
    n_pad = pl.cdiv(n, tn) * tn
    if n_pad != n:
        rows = jnp.pad(rows, ((0, n_pad - n), (0, 0)))

    out = pl.pallas_call(
        _fused_matmul_kernel,
        out_shape=jax.ShapeDtypeStruct((n_pad, m), out_dtype),
        grid=(n_pad // tn,),
        in_specs=[
            pl.BlockSpec((tn, k), lambda i: (i, 0)),
            # Constant index_map: the fused weight is DMA'd once and stays
            # resident (no re-fetch across steps).  Single-buffering it via
            # pl.Buffered(1) was skipped deliberately: at ~350 KB bf16 the
            # extra buffer is negligible next to the VMEM budget.
            pl.BlockSpec((k, m), lambda i: (0, 0)),
        ],
        out_specs=pl.BlockSpec((tn, m), lambda i: (i, 0)),
        compiler_params=pltpu.CompilerParams(
            dimension_semantics=("parallel",),
            vmem_limit_bytes=32 << 20,   # headroom for tile_n up to ~2048 on v5e
        ),
    )(rows, w_fused)
    return out[:n]


# ---------------------------------------------------------------------------
# One-time weight fold (hoist out of the per-call path).
# ---------------------------------------------------------------------------
def make_fused_weight(down_w, down_b, merge_w, merge_b, ww):
    """Fold down_proj + broadcast-concat + merge_feat + bias into one matrix.

    PyTorch (out, in) weight layout.  Returns (ww*Cf + Cc + 1, ww*Cout) bf16.
    Compute once per parameter set and reuse across forward calls.
    """
    hp = jax.lax.Precision.HIGHEST
    merge_w = jnp.asarray(merge_w, jnp.float32)
    down_w = jnp.asarray(down_w, jnp.float32)
    down_b = jnp.asarray(down_b, jnp.float32)
    merge_b = jnp.asarray(merge_b, jnp.float32)

    cout, two_cf = merge_w.shape
    cf = two_cf // 2
    mw_t = merge_w.T                                  # (2*Cf, Cout)
    mw_top, mw_bot = mw_t[:cf], mw_t[cf:]             # (Cf, Cout) each

    w_fine = jnp.kron(jnp.eye(ww, dtype=jnp.float32), mw_bot)        # (ww*Cf, ww*Cout)
    w_coarse = jnp.tile(jnp.matmul(down_w.T, mw_top, precision=hp),
                        (1, ww))                                      # (Cc, ww*Cout)
    b_row = jnp.tile(jnp.matmul(down_b, mw_top, precision=hp) + merge_b,
                     ww)[None, :]                                     # (1, ww*Cout)
    return jnp.concatenate([w_fine, w_coarse, b_row], axis=0).astype(jnp.bfloat16)


# ---------------------------------------------------------------------------
# JAX glue: vectorized unfold table + contiguous-row gather (no vmapped
# dynamic_slice on the hot path).
# ---------------------------------------------------------------------------
def unfold_window_table(feat_f, window, stride):
    """Vectorized F.unfold(kernel=(W,W), stride, padding=W//2), NHWC inside.

    feat_f: (B, Cf, Hf, Wf).  Returns (B, L, W*W*Cf) with the (ki*W+kj, c)
    inner ordering of torch's rearrange('n (c ww) l -> n l ww c').
    The table is only ~(W/stride)^2 the size of the source map (windows at
    stride 4 barely overlap), so materializing it is cheap.
    """
    b, c, hf, wf = feat_f.shape
    pad = window // 2
    x = jnp.transpose(feat_f, (0, 2, 3, 1))                         # NHWC
    x = jnp.pad(x, ((0, 0), (pad, pad), (pad, pad), (0, 0)))
    h_out = (hf + 2 * pad - window) // stride + 1
    w_out = (wf + 2 * pad - window) // stride + 1
    taps = []
    for ki in range(window):
        for kj in range(window):
            taps.append(x[:, ki:ki + stride * (h_out - 1) + 1:stride,
                             kj:kj + stride * (w_out - 1) + 1:stride, :])
    win = jnp.stack(taps, axis=3)                                    # (B,ho,wo,WW,C)
    return win.reshape(b, h_out * w_out, window * window * c)


def fine_preprocess_forward(feat_f1, feat_c1, b_ids, j_ids, w_fused, *,
                            window, stride, out_channels,
                            out_dtype=jnp.bfloat16):
    """Full FinePreprocess forward (cat_c_feat=True).  Returns (N, W*W, Cout).

    out_dtype defaults to bf16 per the perf review; pass jnp.float32 for a
    bit-compatible stream with the torch module's output dtype.
    """
    ww = window * window
    n = b_ids.shape[0]
    if n == 0:
        # Matches the torch.empty(0, W**2, out_channels) early return.
        return jnp.zeros((0, ww, out_channels), out_dtype)

    # bf16 streaming; f32 accumulation happens inside the kernel.
    win_table = unfold_window_table(feat_f1.astype(jnp.bfloat16), window, stride)
    bsz, n_loc, _ = win_table.shape
    cc = feat_c1.shape[1]
    coarse = jnp.transpose(feat_c1.astype(jnp.bfloat16),
                           (0, 2, 3, 1)).reshape(bsz, -1, cc)        # (B, L, Cc)
    assert coarse.shape[1] == n_loc
    ones = jnp.ones((bsz, n_loc, 1), jnp.bfloat16)                   # bias column
    full = jnp.concatenate([win_table, coarse, ones],
                           axis=-1).reshape(bsz * n_loc, -1)         # (B*L, K)

    # Single contiguous-row gather (1.6 KB/row) replaces the old
    # vmap-of-dynamic_slice window gather.
    # TODO(synk): the data-dependent (b_ids, j_ids) row gather stays in XLA
    # glue; fusing it into the kernel needs per-match DMA / in-VMEM row
    # assembly, which costs more than the bf16 row stream it would save.
    idx = b_ids.astype(jnp.int32) * n_loc + j_ids.astype(jnp.int32)
    rows = full[idx]                                                  # (N, K) bf16

    out = fused_rows_matmul(rows, w_fused, out_dtype=out_dtype)       # (N, ww*Cout)
    return out.reshape(n, ww, out_channels)


# ---------------------------------------------------------------------------
# Reference (pure JAX, mirrors the torch code order-for-order, f32/highest).
# ---------------------------------------------------------------------------
def reference_forward(feat_f1, feat_c1, b_ids, j_ids,
                      down_w, down_b, merge_w, merge_b, window, stride):
    hp = jax.lax.Precision.HIGHEST
    b, c, hf, wf = feat_f1.shape
    pad = window // 2
    w_out = (wf + 2 * pad - window) // stride + 1
    fpad = jnp.pad(feat_f1, ((0, 0), (0, 0), (pad, pad), (pad, pad)))

    def one(bi, j):
        oi, oj = j // w_out, j % w_out
        patch = jax.lax.dynamic_slice(fpad[bi], (0, oi * stride, oj * stride),
                                      (c, window, window))            # (C,W,W)
        return jnp.transpose(patch, (1, 2, 0)).reshape(window * window, c)

    win = jax.vmap(one)(b_ids, j_ids)                                 # (N,WW,Cf)
    bc, cc, hc, wc = feat_c1.shape
    cpick = feat_c1.reshape(bc, cc, hc * wc)[b_ids, :, j_ids]         # (N,Cc)
    down = jnp.matmul(cpick, down_w.T, precision=hp) + down_b         # (N,Cf)
    cat = jnp.concatenate(
        [jnp.repeat(down[:, None, :], window * window, axis=1), win], axis=-1)
    return jnp.matmul(cat, merge_w.T, precision=hp) + merge_b         # (N,WW,Cout)


if __name__ == "__main__":
    # --- config / shapes ----------------------------------------------------
    W = 5                        # fine_window_size
    Cc = 32                      # in_channels_coarse
    Cf = 16                      # in_channels_fine
    Cout = 16                    # out_channels
    B, Hf, Wf = 2, 16, 16
    stride_coarse, stride_fine = 4, 1
    stride = stride_coarse // stride_fine
    Hc, Wc = Hf // stride, Wf // stride

    key = jax.random.PRNGKey(0)
    k1, k2, k3, k4, k5, k6 = jax.random.split(key, 6)

    feat_f1 = jax.random.normal(k1, (B, Cf, Hf, Wf), jnp.float32)
    feat_c1 = jax.random.normal(k2, (B, Cc, Hc, Wc), jnp.float32)
    b_ids = jnp.array([0, 0, 1, 1, 0, 1], jnp.int32)
    j_ids = jnp.array([0, 3, 5, 10, 15, 7], jnp.int32)

    # Parameters: kaiming_normal_(mode='fan_out', relu) => std = sqrt(2/out).
    down_w = jax.random.normal(k3, (Cf, Cc), jnp.float32) * np.sqrt(2.0 / Cf)
    merge_w = jax.random.normal(k4, (Cout, 2 * Cf), jnp.float32) * np.sqrt(2.0 / Cout)
    down_b = jax.random.normal(k5, (Cf,), jnp.float32) * 0.01
    merge_b = jax.random.normal(k6, (Cout,), jnp.float32) * 0.01

    # --- weight fold: computed ONCE per parameter set -----------------------
    w_fused = make_fused_weight(down_w, down_b, merge_w, merge_b, W * W)

    # --- forward (glue + Pallas kernel) -------------------------------------
    out = fine_preprocess_forward(feat_f1, feat_c1, b_ids, j_ids, w_fused,
                                  window=W, stride=stride, out_channels=Cout)
    out = jax.block_until_ready(out)

    # --- validation ----------------------------------------------------------
    ref = reference_forward(feat_f1, feat_c1, b_ids, j_ids,
                            down_w, down_b, merge_w, merge_b, W, stride)
    out_f32 = np.asarray(out, dtype=np.float32)
    ref_f32 = np.asarray(ref, dtype=np.float32)
    # bf16 streaming (per perf review) -> bf16-level tolerances.
    np.testing.assert_allclose(out_f32, ref_f32, rtol=3e-2, atol=1e-1)
    rel = np.linalg.norm(out_f32 - ref_f32) / np.linalg.norm(ref_f32)
    assert rel < 1e-2, f"relative error too large: {rel}"

    print("KERNEL_OK")
</pallas_src>

<mosaic_0001>
module attributes {stable_mosaic.version = 11 : i64} {
  func.func @_fused_matmul_kernel(%arg0: i32, %arg1: memref<16x433xbf16, #tpu.memory_space<vmem>>, %arg2: memref<433x400xbf16, #tpu.memory_space<vmem>>, %arg3: memref<16x400xbf16, #tpu.memory_space<vmem>>) attributes {dimension_semantics = [#tpu.dimension_semantics<parallel>], iteration_bounds = array<i64: 1>, scalar_prefetch = 0 : i64, scratch_operands = 0 : i64, tpu.core_type = #tpu.core_type<tc>, window_params = [{transform_indices = @transform_0, window_bounds = array<i64: 16, 433>}, {pipeline_mode = #tpu.pipeline_mode<synchronous>, transform_indices = @transform_1, window_bounds = array<i64: 433, 400>}, {transform_indices = @transform_2, window_bounds = array<i64: 16, 400>}]} {
    %c0 = arith.constant 0 : index
    %c0_0 = arith.constant 0 : index
    %0 = vector.load %arg1[%c0, %c0_0] : memref<16x433xbf16, #tpu.memory_space<vmem>>, vector<16x433xbf16>
    %c0_1 = arith.constant 0 : index
    %c0_2 = arith.constant 0 : index
    %1 = vector.load %arg2[%c0_1, %c0_2] : memref<433x400xbf16, #tpu.memory_space<vmem>>, vector<433x400xbf16>
    %cst = arith.constant dense<0.000000e+00> : vector<16x400xf32>
    %2 = tpu.matmul %0, %1, %cst {dimension_numbers = #tpu.dot_dimension_numbers<[1], [0], [0], [1], [0, 0, 1, 1], [], []>} : vector<16x433xbf16>, vector<433x400xbf16>, vector<16x400xf32> -> vector<16x400xf32>
    %3 = arith.truncf %2 : vector<16x400xf32> to vector<16x400xbf16>
    %c0_3 = arith.constant 0 : index
    %c0_4 = arith.constant 0 : index
    %4 = vector.load %arg3[%c0_3, %c0_4] : memref<16x400xbf16, #tpu.memory_space<vmem>>, vector<16x400xbf16>
    tpu.vector_store %arg3[%c0_3, %c0_4], %3 {strides = array<i32>} : memref<16x400xbf16, #tpu.memory_space<vmem>>, vector<16x400xbf16>,
    return
  }
  func.func @transform_0(%arg0: i32) -> (i32, i32) {
    %c0_i32 = arith.constant 0 : i32
    %c0_i32_0 = arith.constant 0 : i32
    return %arg0, %c0_i32 : i32, i32
  }
  func.func @transform_1(%arg0: i32) -> (i32, i32) {
    %c0_i32 = arith.constant 0 : i32
    %c0_i32_0 = arith.constant 0 : i32
    %c0_i32_1 = arith.constant 0 : i32
    return %c0_i32, %c0_i32_0 : i32, i32
  }
  func.func @transform_2(%arg0: i32) -> (i32, i32) {
    %c0_i32 = arith.constant 0 : i32
    %c0_i32_0 = arith.constant 0 : i32
    return %arg0, %c0_i32 : i32, i32
  }
}

</mosaic_0001>

<llo_original>
// kernel: tpu_custom_call.1
$region0: #{tpu_custom_call.1}
  #allocation0 [shape = 'u32[]', space=smem, size = 0x4, offset = 0x4, fixed_abs, tag = 'smem constant byte address 0x4 - core index']
  #allocation1 [shape = 'u32[144,128]{1,0:T(1,128)}', space=vmem, size = 0x12000, scoped, tag = 'internal scratch']
  %s0 = inlined_call_operand.vmem [shape: bf16[16,433], index: 0, kind: input, shape index: {}]
  %s1 = inlined_call_operand.vmem [shape: bf16[433,400], index: 1, kind: input, shape index: {}]
  %s2 = inlined_call_operand.hbm [shape: bf16[16,400], index: 2, kind: output, shape index: {}]
  %s3 = sld [smem:[#allocation0]]
  $region18: #{tpu_custom_call.1} parent=0
    _
  %s5 = ssub.s32 1, %s3
  %s6 = scalar_select 0, %s5, %s3
  $region1: #{tpu_custom_call.1} parent=0
    #allocation2 [shape = 'u8[16384]{0}', space=vmem, size = 0x4000, scoped, tag = 'output window, operand 0, single buffered']
    #allocation3 [shape = 's32[1]{0}', space=sflag, size = 0x4, scoped, tag = 'scoped memory for tpu_custom_call.1']
    %7 = vsyncpa [#allocation3], 0
    // Predicated region
    $region2: #{tpu_custom_call.1} parent=1 // pred_check
      _
    $region3: #{tpu_custom_call.1} parent=1 // pred_check_branch
      %9 = sbr.rel (0) target = $region5
    $region4: #{tpu_custom_call.1} parent=1 // pred_region
      _
    $region5: #{tpu_custom_call.1} parent=1 // pred_fallthru
      _
    // Predicated region
    $region6: #{tpu_custom_call.1} parent=1 // pred_check
      _
    $region7: #{tpu_custom_call.1} parent=1 // pred_check_branch
      %11 = sbr.rel (0) target = $region9
    $region8: #{tpu_custom_call.1} parent=1 // pred_region
      _
    $region9: #{tpu_custom_call.1} parent=1 // pred_fallthru
      _
    %v13 = vld [vmem:[%s0] sm:$0xff]
    %v14 = vld [vmem:[%s0 + $0x8] sm:$0xff]
    %v15 = vld [vmem:[%s0 + $0x10] sm:$0xff]
    %v16 = vld [vmem:[%s0 + $0x18] sm:$0xff]
    %v17 = vld [vmem:[%s1] sm:$0xff]
    %v18 = vld [vmem:[%s1 + $0x8] sm:$0xff]
    %v19 = vld [vmem:[%s1 + $0x10] sm:$0xff]
    %v20 = vld [vmem:[%s1 + $0x18] sm:$0xff]
    %v21 = vld [vmem:[%s1 + $0x20] sm:$0xff]
    %v22 = vld [vmem:[%s1 + $0x28] sm:$0xff]
    %v23 = vld [vmem:[%s1 + $0x30] sm:$0xff]
    %v24 = vld [vmem:[%s1 + $0x38] sm:$0xff]
    %v25 = vld [vmem:[%s1 + $0x40] sm:$0xff]
    %v26 = vld [vmem:[%s1 + $0x48] sm:$0xff]
    %v27 = vld [vmem:[%s1 + $0x50] sm:$0xff]
    %v28 = vld [vmem:[%s1 + $0x58] sm:$0xff]
    %v29 = vld [vmem:[%s1 + $0x60] sm:$0xff]
    %v30 = vld [vmem:[%s1 + $0x68] sm:$0xff]
    %v31 = vld [vmem:[%s1 + $0x70] sm:$0xff]
    %v32 = vld [vmem:[%s1 + $0x78] sm:$0xff]
    %v33 = vld [vmem:[%s1 + $0x80] sm:$0xff]
    %v34 = vld [vmem:[%s1 + $0x88] sm:$0xff]
    %v35 = vld [vmem:[%s1 + $0x90] sm:$0xff]
    %v36 = vld [vmem:[%s1 + $0x98] sm:$0xff]
    %v37 = vld [vmem:[%s1 + $0xa0] sm:$0xff]
    %v38 = vld [vmem:[%s1 + $0xa8] sm:$0xff]
    %v39 = vld [vmem:[%s1 + $0xb0] sm:$0xff]
    %v40 = vld [vmem:[%s1 + $0xb8] sm:$0xff]
    %v41 = vld [vmem:[%s1 + $0xc0] sm:$0xff]
    %v42 = vld [vmem:[%s1 + $0xc8] sm:$0xff]
    %v43 = vld [vmem:[%s1 + $0xd0] sm:$0xff]
    %v44 = vld [vmem:[%s1 + $0xd8] sm:$0xff]
    %v45 = vld [vmem:[%s1 + $0xe0] sm:$0xff]
    %v46 = vld [vmem:[%s1 + $0xe8] sm:$0xff]
    %v47 = vld [vmem:[%s1 + $0xf0] sm:$0xff]
    %v48 = vld [vmem:[%s1 + $0xf8] sm:$0xff]
    %v49 = vld [vmem:[%s1 + $0x100] sm:$0xff]
    %v50 = vld [vmem:[%s1 + $0x108] sm:$0xff]
    %v51 = vld [vmem:[%s1 + $0x110] sm:$0xff]
    %v52 = vld [vmem:[%s1 + $0x118] sm:$0xff]
    %v53 = vld [vmem:[%s1 + $0x120] sm:$0xff]
    %v54 = vld [vmem:[%s1 + $0x128] sm:$0xff]
    %v55 = vld [vmem:[%s1 + $0x130] sm:$0xff]
    %v56 = vld [vmem:[%s1 + $0x138] sm:$0xff]
    %v57 = vld [vmem:[%s1 + $0x140] sm:$0xff]
    %v58 = vld [vmem:[%s1 + $0x148] sm:$0xff]
    %v59 = vld [vmem:[%s1 + $0x150] sm:$0xff]
    %v60 = vld [vmem:[%s1 + $0x158] sm:$0xff]
    %v61 = vld [vmem:[%s1 + $0x160] sm:$0xff]
    %v62 = vld [vmem:[%s1 + $0x168] sm:$0xff]
    %v63 = vld [vmem:[%s1 + $0x170] sm:$0xff]
    %v64 = vld [vmem:[%s1 + $0x178] sm:$0xff]
    %v65 = vld [vmem:[%s1 + $0x180] sm:$0xff]
    %v66 = vld [vmem:[%s1 + $0x188] sm:$0xff]
    %v67 = vld [vmem:[%s1 + $0x190] sm:$0xff]
    %v68 = vld [vmem:[%s1 + $0x198] sm:$0xff]
    %v69 = vld [vmem:[%s1 + $0x1a0] sm:$0xff]
    %v70 = vld [vmem:[%s1 + $0x1a8] sm:$0xff]
    %v71 = vld [vmem:[%s1 + $0x1b0] sm:$0xff]
    %v72 = vld [vmem:[%s1 + $0x1b8] sm:$0xff]
    %v73 = vld [vmem:[%s1 + $0x1c0] sm:$0xff]
    %v74 = vld [vmem:[%s1 + $0x1c8] sm:$0xff]
    %v75 = vld [vmem:[%s1 + $0x1d0] sm:$0xff]
    %v76 = vld [vmem:[%s1 + $0x1d8] sm:$0xff]
    %v77 = vld [vmem:[%s1 + $0x1e0] sm:$0xff]
    %v78 = vld [vmem:[%s1 + $0x1e8] sm:$0xff]
    %v79 = vld [vmem:[%s1 + $0x1f0] sm:$0xff]
    %v80 = vld [vmem:[%s1 + $0x1f8] sm:$0xff]
    %v81 = vld [vmem:[%s1 + $0x200] sm:$0xff]
    %v82 = vld [vmem:[%s1 + $0x208] sm:$0xff]
    %v83 = vld [vmem:[%s1 + $0x210] sm:$0xff]
    %v84 = vld [vmem:[%s1 + $0x218] sm:$0xff]
    %v85 = vld [vmem:[%s1 + $0x220] sm:$0xff]
    %v86 = vld [vmem:[%s1 + $0x228] sm:$0xff]
    %v87 = vld [vmem:[%s1 + $0x230] sm:$0xff]
    %v88 = vld [vmem:[%s1 + $0x238] sm:$0xff]
    %v89 = vld [vmem:[%s1 + $0x240] sm:$0xff]
    %v90 = vld [vmem:[%s1 + $0x248] sm:$0xff]
    %v91 = vld [vmem:[%s1 + $0x250] sm:$0xff]
    %v92 = vld [vmem:[%s1 + $0x258] sm:$0xff]
    %v93 = vld [vmem:[%s1 + $0x260] sm:$0xff]
    %v94 = vld [vmem:[%s1 + $0x268] sm:$0xff]
    %v95 = vld [vmem:[%s1 + $0x270] sm:$0xff]
    %v96 = vld [vmem:[%s1 + $0x278] sm:$0xff]
    %v97 = vld [vmem:[%s1 + $0x280] sm:$0xff]
    %v98 = vld [vmem:[%s1 + $0x288] sm:$0xff]
    %v99 = vld [vmem:[%s1 + $0x290] sm:$0xff]
    %v100 = vld [vmem:[%s1 + $0x298] sm:$0xff]
    %v101 = vld [vmem:[%s1 + $0x2a0] sm:$0xff]
    %v102 = vld [vmem:[%s1 + $0x2a8] sm:$0xff]
    %v103 = vld [vmem:[%s1 + $0x2b0] sm:$0xff]
    %v104 = vld [vmem:[%s1 + $0x2b8] sm:$0xff]
    %v105 = vld [vmem:[%s1 + $0x2c0] sm:$0xff]
    %v106 = vld [vmem:[%s1 + $0x2c8] sm:$0xff]
    %v107 = vld [vmem:[%s1 + $0x2d0] sm:$0xff]
    %v108 = vld [vmem:[%s1 + $0x2d8] sm:$0xff]
    %v109 = vld [vmem:[%s1 + $0x2e0] sm:$0xff]
    %v110 = vld [vmem:[%s1 + $0x2e8] sm:$0xff]
    %v111 = vld [vmem:[%s1 + $0x2f0] sm:$0xff]
    %v112 = vld [vmem:[%s1 + $0x2f8] sm:$0xff]
    %v113 = vld [vmem:[%s1 + $0x300] sm:$0xff]
    %v114 = vld [vmem:[%s1 + $0x308] sm:$0xff]
    %v115 = vld [vmem:[%s1 + $0x310] sm:$0xff]
    %v116 = vld [vmem:[%s1 + $0x318] sm:$0xff]
    %v117 = vld [vmem:[%s1 + $0x320] sm:$0xff]
    %v118 = vld [vmem:[%s1 + $0x328] sm:$0xff]
    %v119 = vld [vmem:[%s1 + $0x330] sm:$0xff]
    %v120 = vld [vmem:[%s1 + $0x338] sm:$0xff]
    %v121 = vld [vmem:[%s1 + $0x340] sm:$0xff]
    %v122 = vld [vmem:[%s1 + $0x348] sm:$0xff]
    %v123 = vld [vmem:[%s1 + $0x350] sm:$0xff]
    %v124 = vld [vmem:[%s1 + $0x358] sm:$0xff]
    %v125 = vld [vmem:[%s1 + $0x360] sm:$0x11]
    %v126 = vld [vmem:[%s1 + $0x368] sm:$0x11]
    %v131 = vunpack.c.l.b16 %v13
    %v132 = vunpack.c.h.b16 %v13
    %v133 = vunpack.c.l.b16 %v14
    %v134 = vunpack.c.h.b16 %v14
    %v135 = vunpack.c.l.b16 %v15
    %v136 = vunpack.c.h.b16 %v15
    %v137 = vunpack.c.l.b16 %v16
    %v138 = vunpack.c.h.b16 %v16
    %v139 = vpack.c.b16 %v135, %v131
    %v140 = vpack.c.b16 %v136, %v132
    %v141 = vpack.c.b16 %v137, %v133
    %v142 = vpack.c.b16 %v138, %v134
    %v256 = vunpack.c.l.b16 %v17
    %v257 = vunpack.c.h.b16 %v17
    %v258 = vunpack.c.l.b16 %v18
    %v259 = vunpack.c.h.b16 %v18
    %v260 = vunpack.c.l.b16 %v19
    %v261 = vunpack.c.h.b16 %v19
    %v262 = vunpack.c.l.b16 %v20
    %v263 = vunpack.c.h.b16 %v20
    %v264 = vunpack.c.l.b16 %v21
    %v265 = vunpack.c.h.b16 %v21
    %v266 = vunpack.c.l.b16 %v22
    %v267 = vunpack.c.h.b16 %v22
    %v268 = vunpack.c.l.b16 %v23
    %v269 = vunpack.c.h.b16 %v23
    %v270 = vunpack.c.l.b16 %v24
    %v271 = vunpack.c.h.b16 %v24
    %v272 = vunpack.c.l.b16 %v25
    %v273 = vunpack.c.h.b16 %v25
    %v274 = vunpack.c.l.b16 %v26
    %v275 = vunpack.c.h.b16 %v26
    %v276 = vunpack.c.l.b16 %v27
    %v277 = vunpack.c.h.b16 %v27
    %v278 = vunpack.c.l.b16 %v28
    %v279 = vunpack.c.h.b16 %v28
    %v280 = vunpack.c.l.b16 %v29
    %v281 = vunpack.c.h.b16 %v29
    %v282 = vunpack.c.l.b16 %v30
    %v283 = vunpack.c.h.b16 %v30
    %v284 = vunpack.c.l.b16 %v31
    %v285 = vunpack.c.h.b16 %v31
    %v286 = vunpack.c.l.b16 %v32
    %v287 = vunpack.c.h.b16 %v32
    %v288 = vunpack.c.l.b16 %v33
    %v289 = vunpack.c.h.b16 %v33
    %v290 = vunpack.c.l.b16 %v34
    %v291 = vunpack.c.h.b16 %v34
    %v292 = vunpack.c.l.b16 %v35
    %v293 = vunpack.c.h.b16 %v35
    %v294 = vunpack.c.l.b16 %v36
    %v295 = vunpack.c.h.b16 %v36
    %v296 = vunpack.c.l.b16 %v37
    %v297 = vunpack.c.h.b16 %v37
    %v298 = vunpack.c.l.b16 %v38
    %v299 = vunpack.c.h.b16 %v38
    %v300 = vunpack.c.l.b16 %v39
    %v301 = vunpack.c.h.b16 %v39
    %v302 = vunpack.c.l.b16 %v40
    %v303 = vunpack.c.h.b16 %v40
    %v304 = vunpack.c.l.b16 %v41
    %v305 = vunpack.c.h.b16 %v41
    %v306 = vunpack.c.l.b16 %v42
    %v307 = vunpack.c.h.b16 %v42
    %v308 = vunpack.c.l.b16 %v43
    %v309 = vunpack.c.h.b16 %v43
    %v310 = vunpack.c.l.b16 %v44
    %v311 = vunpack.c.h.b16 %v44
    %v312 = vunpack.c.l.b16 %v45
    %v313 = vunpack.c.h.b16 %v45
    %v314 = vunpack.c.l.b16 %v46
    %v315 = vunpack.c.h.b16 %v46
    %v316 = vunpack.c.l.b16 %v47
    %v317 = vunpack.c.h.b16 %v47
    %v318 = vunpack.c.l.b16 %v48
    %v319 = vunpack.c.h.b16 %v48
    %v320 = vunpack.c.l.b16 %v49
    %v321 = vunpack.c.h.b16 %v49
    %v322 = vunpack.c.l.b16 %v50
    %v323 = vunpack.c.h.b16 %v50
    %v324 = vunpack.c.l.b16 %v51
    %v325 = vunpack.c.h.b16 %v51
    %v326 = vunpack.c.l.b16 %v52
    %v327 = vunpack.c.h.b16 %v52
    %v328 = vunpack.c.l.b16 %v53
    %v329 = vunpack.c.h.b16 %v53
    %v330 = vunpack.c.l.b16 %v54
    %v331 = vunpack.c.h.b16 %v54
    %v332 = vunpack.c.l.b16 %v55
    %v333 = vunpack.c.h.b16 %v55
    %v334 = vunpack.c.l.b16 %v56
    %v335 = vunpack.c.h.b16 %v56
    %v336 = vunpack.c.l.b16 %v57
    %v337 = vunpack.c.h.b16 %v57
    %v338 = vunpack.c.l.b16 %v58
    %v339 = vunpack.c.h.b16 %v58
    %v340 = vunpack.c.l.b16 %v59
    %v341 = vunpack.c.h.b16 %v59
    %v342 = vunpack.c.l.b16 %v60
    %v343 = vunpack.c.h.b16 %v60
    %v344 = vunpack.c.l.b16 %v61
    %v345 = vunpack.c.h.b16 %v61
    %v346 = vunpack.c.l.b16 %v62
    %v347 = vunpack.c.h.b16 %v62
    %v348 = vunpack.c.l.b16 %v63
    %v349 = vunpack.c.h.b16 %v63
    %v350 = vunpack.c.l.b16 %v64
    %v351 = vunpack.c.h.b16 %v64
    %v352 = vunpack.c.l.b16 %v65
    %v353 = vunpack.c.h.b16 %v65
    %v354 = vunpack.c.l.b16 %v66
    %v355 = vunpack.c.h.b16 %v66
    %v356 = vunpack.c.l.b16 %v67
    %v357 = vunpack.c.h.b16 %v67
    %v358 = vunpack.c.l.b16 %v68
    %v359 = vunpack.c.h.b16 %v68
    %v360 = vunpack.c.l.b16 %v69
    %v361 = vunpack.c.h.b16 %v69
    %v362 = vunpack.c.l.b16 %v70
    %v363 = vunpack.c.h.b16 %v70
    %v364 = vunpack.c.l.b16 %v71
    %v365 = vunpack.c.h.b16 %v71
    %v366 = vunpack.c.l.b16 %v72
    %v367 = vunpack.c.h.b16 %v72
    %v368 = vunpack.c.l.b16 %v73
    %v369 = vunpack.c.h.b16 %v73
    %v370 = vunpack.c.l.b16 %v74
    %v371 = vunpack.c.h.b16 %v74
    %v372 = vunpack.c.l.b16 %v75
    %v373 = vunpack.c.h.b16 %v75
    %v374 = vunpack.c.l.b16 %v76
    %v375 = vunpack.c.h.b16 %v76
    %v376 = vunpack.c.l.b16 %v77
    %v377 = vunpack.c.h.b16 %v77
    %v378 = vunpack.c.l.b16 %v78
    %v379 = vunpack.c.h.b16 %v78
    %v380 = vunpack.c.l.b16 %v79
    %v381 = vunpack.c.h.b16 %v79
    %v382 = vunpack.c.l.b16 %v80
    %v383 = vunpack.c.h.b16 %v80
    %v384 = vunpack.c.l.b16 %v81
    %v385 = vunpack.c.h.b16 %v81
    %v386 = vunpack.c.l.b16 %v82
    %v387 = vunpack.c.h.b16 %v82
    %v388 = vunpack.c.l.b16 %v83
    %v389 = vunpack.c.h.b16 %v83
    %v390 = vunpack.c.l.b16 %v84
    %v391 = vunpack.c.h.b16 %v84
    %v392 = vunpack.c.l.b16 %v85
    %v393 = vunpack.c.h.b16 %v85
    %v394 = vunpack.c.l.b16 %v86
    %v395 = vunpack.c.h.b16 %v86
    %v396 = vunpack.c.l.b16 %v87
    %v397 = vunpack.c.h.b16 %v87
    %v398 = vunpack.c.l.b16 %v88
    %v399 = vunpack.c.h.b16 %v88
    %v400 = vunpack.c.l.b16 %v89
    %v401 = vunpack.c.h.b16 %v89
    %v402 = vunpack.c.l.b16 %v90
    %v403 = vunpack.c.h.b16 %v90
    %v404 = vunpack.c.l.b16 %v91
    %v405 = vunpack.c.h.b16 %v91
    %v406 = vunpack.c.l.b16 %v92
    %v407 = vunpack.c.h.b16 %v92
    %v408 = vunpack.c.l.b16 %v93
    %v409 = vunpack.c.h.b16 %v93
    %v410 = vunpack.c.l.b16 %v94
    %v411 = vunpack.c.h.b16 %v94
    %v412 = vunpack.c.l.b16 %v95
    %v413 = vunpack.c.h.b16 %v95
    %v414 = vunpack.c.l.b16 %v96
    %v415 = vunpack.c.h.b16 %v96
    %v416 = vunpack.c.l.b16 %v97
    %v417 = vunpack.c.h.b16 %v97
    %v418 = vunpack.c.l.b16 %v98
    %v419 = vunpack.c.h.b16 %v98
    %v420 = vunpack.c.l.b16 %v99
    %v421 = vunpack.c.h.b16 %v99
    %v422 = vunpack.c.l.b16 %v100
    %v423 = vunpack.c.h.b16 %v100
    %v424 = vunpack.c.l.b16 %v101
    %v425 = vunpack.c.h.b16 %v101
    %v426 = vunpack.c.l.b16 %v102
    %v427 = vunpack.c.h.b16 %v102
    %v428 = vunpack.c.l.b16 %v103
    %v429 = vunpack.c.h.b16 %v103
    %v430 = vunpack.c.l.b16 %v104
    %v431 = vunpack.c.h.b16 %v104
    %v432 = vunpack.c.l.b16 %v105
    %v433 = vunpack.c.h.b16 %v105
    %v434 = vunpack.c.l.b16 %v106
    %v435 = vunpack.c.h.b16 %v106
    %v436 = vunpack.c.l.b16 %v107
    %v437 = vunpack.c.h.b16 %v107
    %v438 = vunpack.c.l.b16 %v108
    %v439 = vunpack.c.h.b16 %v108
    %v440 = vunpack.c.l.b16 %v109
    %v441 = vunpack.c.h.b16 %v109
    %v442 = vunpack.c.l.b16 %v110
    %v443 = vunpack.c.h.b16 %v110
    %v444 = vunpack.c.l.b16 %v111
    %v445 = vunpack.c.h.b16 %v111
    %v446 = vunpack.c.l.b16 %v112
    %v447 = vunpack.c.h.b16 %v112
    %v448 = vunpack.c.l.b16 %v113
    %v449 = vunpack.c.h.b16 %v113
    %v450 = vunpack.c.l.b16 %v114
    %v451 = vunpack.c.h.b16 %v114
    %v452 = vunpack.c.l.b16 %v115
    %v453 = vunpack.c.h.b16 %v115
    %v454 = vunpack.c.l.b16 %v116
    %v455 = vunpack.c.h.b16 %v116
    %v456 = vunpack.c.l.b16 %v117
    %v457 = vunpack.c.h.b16 %v117
    %v458 = vunpack.c.l.b16 %v118
    %v459 = vunpack.c.h.b16 %v118
    %v460 = vunpack.c.l.b16 %v119
    %v461 = vunpack.c.h.b16 %v119
    %v462 = vunpack.c.l.b16 %v120
    %v463 = vunpack.c.h.b16 %v120
    %v464 = vunpack.c.l.b16 %v121
    %v465 = vunpack.c.h.b16 %v121
    %v466 = vunpack.c.l.b16 %v122
    %v467 = vunpack.c.h.b16 %v122
    %v468 = vunpack.c.l.b16 %v123
    %v469 = vunpack.c.h.b16 %v123
    %v470 = vunpack.c.l.b16 %v124
    %v471 = vunpack.c.h.b16 %v124
    %v472 = vunpack.c.l.b16 %v125
    %v473 = vunpack.c.h.b16 %v125
    %v474 = vunpack.c.l.b16 %v126
    %v475 = vunpack.c.h.b16 %v126
    %v476 = vpack.c.b16 %v260, %v256
    %v477 = vpack.c.b16 %v261, %v257
    %v478 = vpack.c.b16 %v262, %v258
    %v479 = vpack.c.b16 %v263, %v259
    %v480 = vpack.c.b16 %v268, %v264
    %v481 = vpack.c.b16 %v269, %v265
    %v482 = vpack.c.b16 %v270, %v266
    %v483 = vpack.c.b16 %v271, %v267
    %v484 = vpack.c.b16 %v276, %v272
    %v485 = vpack.c.b16 %v277, %v273
    %v486 = vpack.c.b16 %v278, %v274
    %v487 = vpack.c.b16 %v279, %v275
    %v488 = vpack.c.b16 %v284, %v280
    %v489 = vpack.c.b16 %v285, %v281
    %v490 = vpack.c.b16 %v286, %v282
    %v491 = vpack.c.b16 %v287, %v283
    %v492 = vpack.c.b16 %v292, %v288
    %v493 = vpack.c.b16 %v293, %v289
    %v494 = vpack.c.b16 %v294, %v290
    %v495 = vpack.c.b16 %v295, %v291
    %v496 = vpack.c.b16 %v300, %v296
    %v497 = vpack.c.b16 %v301, %v297
    %v498 = vpack.c.b16 %v302, %v298
    %v499 = vpack.c.b16 %v303, %v299
    %v500 = vpack.c.b16 %v308, %v304
    %v501 = vpack.c.b16 %v309, %v305
    %v502 = vpack.c.b16 %v310, %v306
    %v503 = vpack.c.b16 %v311, %v307
    %v504 = vpack.c.b16 %v316, %v312
    %v505 = vpack.c.b16 %v317, %v313
    %v506 = vpack.c.b16 %v318, %v314
    %v507 = vpack.c.b16 %v319, %v315
    %v508 = vpack.c.b16 %v324, %v320
    %v509 = vpack.c.b16 %v325, %v321
    %v510 = vpack.c.b16 %v326, %v322
    %v511 = vpack.c.b16 %v327, %v323
    %v512 = vpack.c.b16 %v332, %v328
    %v513 = vpack.c.b16 %v333, %v329
    %v514 = vpack.c.b16 %v334, %v330
    %v515 = vpack.c.b16 %v335, %v331
    %v516 = vpack.c.b16 %v340, %v336
    %v517 = vpack.c.b16 %v341, %v337
    %v518 = vpack.c.b16 %v342, %v338
    %v519 = vpack.c.b16 %v343, %v339
    %v520 = vpack.c.b16 %v348, %v344
    %v521 = vpack.c.b16 %v349, %v345
    %v522 = vpack.c.b16 %v350, %v346
    %v523 = vpack.c.b16 %v351, %v347
    %v524 = vpack.c.b16 %v356, %v352
    %v525 = vpack.c.b16 %v357, %v353
    %v526 = vpack.c.b16 %v358, %v354
    %v527 = vpack.c.b16 %v359, %v355
    %v528 = vpack.c.b16 %v364, %v360
    %v529 = vpack.c.b16 %v365, %v361
    %v530 = vpack.c.b16 %v366, %v362
    %v531 = vpack.c.b16 %v367, %v363
    %v532 = vpack.c.b16 %v372, %v368
    %v533 = vpack.c.b16 %v373, %v369
    %v534 = vpack.c.b16 %v374, %v370
    %v535 = vpack.c.b16 %v375, %v371
    %v536 = vpack.c.b16 %v380, %v376
    %v537 = vpack.c.b16 %v381, %v377
    %v538 = vpack.c.b16 %v382, %v378
    %v539 = vpack.c.b16 %v383, %v379
    %v540 = vpack.c.b16 %v388, %v384
    %v541 = vpack.c.b16 %v389, %v385
    %v542 = vpack.c.b16 %v390, %v386
    %v543 = vpack.c.b16 %v391, %v387
    %v544 = vpack.c.b16 %v396, %v392
    %v545 = vpack.c.b16 %v397, %v393
    %v546 = vpack.c.b16 %v398, %v394
    %v547 = vpack.c.b16 %v399, %v395
    %v548 = vpack.c.b16 %v404, %v400
    %v549 = vpack.c.b16 %v405, %v401
    %v550 = vpack.c.b16 %v406, %v402
    %v551 = vpack.c.b16 %v407, %v403
    %v552 = vpack.c.b16 %v412, %v408
    %v553 = vpack.c.b16 %v413, %v409
    %v554 = vpack.c.b16 %v414, %v410
    %v555 = vpack.c.b16 %v415, %v411
    %v556 = vpack.c.b16 %v420, %v416
    %v557 = vpack.c.b16 %v421, %v417
    %v558 = vpack.c.b16 %v422, %v418
    %v559 = vpack.c.b16 %v423, %v419
    %v560 = vpack.c.b16 %v428, %v424
    %v561 = vpack.c.b16 %v429, %v425
    %v562 = vpack.c.b16 %v430, %v426
    %v563 = vpack.c.b16 %v431, %v427
    %v564 = vpack.c.b16 %v436, %v432
    %v565 = vpack.c.b16 %v437, %v433
    %v566 = vpack.c.b16 %v438, %v434
    %v567 = vpack.c.b16 %v439, %v435
    %v568 = vpack.c.b16 %v444, %v440
    %v569 = vpack.c.b16 %v445, %v441
    %v570 = vpack.c.b16 %v446, %v442
    %v571 = vpack.c.b16 %v447, %v443
    %v572 = vpack.c.b16 %v452, %v448
    %v573 = vpack.c.b16 %v453, %v449
    %v574 = vpack.c.b16 %v454, %v450
    %v575 = vpack.c.b16 %v455, %v451
    %v576 = vpack.c.b16 %v460, %v456
    %v577 = vpack.c.b16 %v461, %v457
    %v578 = vpack.c.b16 %v462, %v458
    %v579 = vpack.c.b16 %v463, %v459
    %v580 = vpack.c.b16 %v468, %v464
    %v581 = vpack.c.b16 %v469, %v465
    %v582 = vpack.c.b16 %v470, %v466
    %v583 = vpack.c.b16 %v471, %v467
    %v584 = vpack.c.b16 %v472, %v472
    %v585 = vpack.c.b16 %v473, %v473
    %v586 = vpack.c.b16 %v474, %v474
    %v587 = vpack.c.b16 %v475, %v475
    %vm696 = vcmask 400384
    %v698 = vsel %vm696, %v142, 0
    %vm700 = vcmask 1040384
    %v701 = vsel 0, 4294967295, 65535
    %v702 = vsel %vm700, %v701, 0
    %v704 = vand.u32 %v584, %v702
    %v707 = vand.u32 %v585, %v702
    %v710 = vand.u32 %v586, %v702
    %v713 = vand.u32 %v587, %v702
    %715 = vmatprep.subr.bf16.mxu0 %v477
    %716 = vmatpush1.bf16.msra.mxu0 %v476
    %717 = vmatprep.subr.bf16.mxu0 %v481
    %718 = vmatpush1.bf16.msra.mxu0 %v480
    %719 = vmatprep.subr.bf16.mxu0 %v485
    %720 = vmatpush1.bf16.msra.mxu0 %v484
    %721 = vmatprep.subr.bf16.mxu0 %v489
    %722 = vmatpush1.bf16.msra.mxu0 %v488
    %723 = vmatprep.subr.bf16.mxu0 %v493
    %724 = vmatpush1.bf16.msra.mxu0 %v492
    %725 = vmatprep.subr.bf16.mxu0 %v497
    %726 = vmatpush1.bf16.msra.mxu0 %v496
    %727 = vmatprep.subr.bf16.mxu0 %v501
    %728 = vmatpush1.bf16.msra.mxu0 %v500
    %729 = vmatprep.subr.bf16.mxu0 %v505
    %730 = vmatpush1.bf16.msra.mxu0 %v504
    %731 = vmatprep.subr.bf16.mxu0 %v509
    %732 = vmatpush1.bf16.msra.mxu0 %v508
    %733 = vmatprep.subr.bf16.mxu0 %v513
    %734 = vmatpush1.bf16.msra.mxu0 %v512
    %735 = vmatprep.subr.bf16.mxu0 %v517
    %736 = vmatpush1.bf16.msra.mxu0 %v516
    %737 = vmatprep.subr.bf16.mxu0 %v521
    %738 = vmatpush1.bf16.msra.mxu0 %v520
    %739 = vmatprep.subr.bf16.mxu0 %v525
    %740 = vmatpush1.bf16.msra.mxu0 %v524
    %741 = vmatprep.subr.bf16.mxu0 %v529
    %742 = vmatpush1.bf16.msra.mxu0 %v528
    %743 = vmatprep.subr.bf16.mxu0 %v533
    %744 = vmatpush1.bf16.msra.mxu0 %v532
    %745 = vmatprep.subr.bf16.mxu0 %v537
    %746 = vmatpush1.bf16.msra.mxu0 %v536
    %747 = vmatprep.mubr.bf16.mxu0 %v140
    %748 = vmatmul.mubr.bf16.gmra.mrb[0].mxu0 %v139
    %v749 = vpop.f32.mrb[0].mxu0
    %v750 = vadd.f32 0.0, %v749
    %v751 = vpop.f32.mrb[0].mxu0
    %v752 = vadd.f32 0.0, %v751
    %v753 = vpop.f32.mrb[0].mxu0
    %v754 = vadd.f32 0.0, %v753
    %v755 = vpop.f32.mrb[0].mxu0
    %v756 = vadd.f32 0.0, %v755
    %757 = vdwg.mxu0
    %758 = vmatprep.subr.bf16.mxu0 %v541
    %759 = vmatpush1.bf16.msra.mxu0 %v540
    %760 = vmatprep.subr.bf16.mxu0 %v545
    %761 = vmatpush1.bf16.msra.mxu0 %v544
    %762 = vmatprep.subr.bf16.mxu0 %v549
    %763 = vmatpush1.bf16.msra.mxu0 %v548
    %764 = vmatprep.subr.bf16.mxu0 %v553
    %765 = vmatpush1.bf16.msra.mxu0 %v552
    %766 = vmatprep.subr.bf16.mxu0 %v557
    %767 = vmatpush1.bf16.msra.mxu0 %v556
    %768 = vmatprep.subr.bf16.mxu0 %v561
    %769 = vmatpush1.bf16.msra.mxu0 %v560
    %770 = vmatprep.subr.bf16.mxu0 %v565
    %771 = vmatpush1.bf16.msra.mxu0 %v564
    %772 = vmatprep.subr.bf16.mxu0 %v569
    %773 = vmatpush1.bf16.msra.mxu0 %v568
    %774 = vmatprep.subr.bf16.mxu0 %v573
    %775 = vmatpush1.bf16.msra.mxu0 %v572
    %776 = vmatprep.subr.bf16.mxu0 %v577
    %777 = vmatpush1.bf16.msra.mxu0 %v576
    %778 = vmatprep.subr.bf16.mxu0 %v581
    %779 = vmatpush1.bf16.msra.mxu0 %v580
    %780 = vmatprep.subr.bf16.mxu0 %v707
    %781 = vmatpush1.bf16.msra.mxu0 %v704
    %782 = vmatprep.subr.bf16.mxu0 0
    %783 = vmatpush1.bf16.msra.mxu0 0
    %784 = vmatprep.subr.bf16.mxu0 0
    %785 = vmatpush1.bf16.msra.mxu0 0
    %786 = vmatprep.subr.bf16.mxu0 0
    %787 = vmatpush1.bf16.msra.mxu0 0
    %788 = vmatprep.subr.bf16.mxu0 0
    %789 = vmatpush1.bf16.msra.mxu0 0
    %790 = vmatprep.mubr.bf16.mxu0 %v698
    %791 = vmatmul.mubr.bf16.gmra.mrb[0].mxu0 %v141
    %v792 = vpop.f32.mrb[0].mxu0
    %v793 = vadd.f32 %v750, %v792
    %v794 = vpop.f32.mrb[0].mxu0
    %v795 = vadd.f32 %v752, %v794
    %v796 = vpop.f32.mrb[0].mxu0
    %v797 = vadd.f32 %v754, %v796
    %v798 = vpop.f32.mrb[0].mxu0
    %v799 = vadd.f32 %v756, %v798
    %800 = vdwg.mxu0
    %801 = vmatprep.subr.bf16.mxu0 %v479
    %802 = vmatpush1.bf16.msra.mxu0 %v478
    %803 = vmatprep.subr.bf16.mxu0 %v483
    %804 = vmatpush1.bf16.msra.mxu0 %v482
    %805 = vmatprep.subr.bf16.mxu0 %v487
    %806 = vmatpush1.bf16.msra.mxu0 %v486
    %807 = vmatprep.subr.bf16.mxu0 %v491
    %808 = vmatpush1.bf16.msra.mxu0 %v490
    %809 = vmatprep.subr.bf16.mxu0 %v495
    %810 = vmatpush1.bf16.msra.mxu0 %v494
    %811 = vmatprep.subr.bf16.mxu0 %v499
    %812 = vmatpush1.bf16.msra.mxu0 %v498
    %813 = vmatprep.subr.bf16.mxu0 %v503
    %814 = vmatpush1.bf16.msra.mxu0 %v502
    %815 = vmatprep.subr.bf16.mxu0 %v507
    %816 = vmatpush1.bf16.msra.mxu0 %v506
    %817 = vmatprep.subr.bf16.mxu0 %v511
    %818 = vmatpush1.bf16.msra.mxu0 %v510
    %819 = vmatprep.subr.bf16.mxu0 %v515
    %820 = vmatpush1.bf16.msra.mxu0 %v514
    %821 = vmatprep.subr.bf16.mxu0 %v519
    %822 = vmatpush1.bf16.msra.mxu0 %v518
    %823 = vmatprep.subr.bf16.mxu0 %v523
    %824 = vmatpush1.bf16.msra.mxu0 %v522
    %825 = vmatprep.subr.bf16.mxu0 %v527
    %826 = vmatpush1.bf16.msra.mxu0 %v526
    %827 = vmatprep.subr.bf16.mxu0 %v531
    %828 = vmatpush1.bf16.msra.mxu0 %v530
    %829 = vmatprep.subr.bf16.mxu0 %v535
    %830 = vmatpush1.bf16.msra.mxu0 %v534
    %831 = vmatprep.subr.bf16.mxu0 %v539
    %832 = vmatpush1.bf16.msra.mxu0 %v538
    %833 = vmatprep.mubr.bf16.mxu0 %v140
    %834 = vmatmul.mubr.bf16.gmra.mrb[0].mxu0 %v139
    %v835 = vpop.f32.mrb[0].mxu0
    %v836 = vadd.f32 0.0, %v835
    %v837 = vpop.f32.mrb[0].mxu0
    %v838 = vadd.f32 0.0, %v837
    %v839 = vpop.f32.mrb[0].mxu0
    %v840 = vadd.f32 0.0, %v839
    %v841 = vpop.f32.mrb[0].mxu0
    %v842 = vadd.f32 0.0, %v841
    %843 = vdwg.mxu0
    %844 = vmatprep.subr.bf16.mxu0 %v543
    %845 = vmatpush1.bf16.msra.mxu0 %v542
    %846 = vmatprep.subr.bf16.mxu0 %v547
    %847 = vmatpush1.bf16.msra.mxu0 %v546
    %848 = vmatprep.subr.bf16.mxu0 %v551
    %849 = vmatpush1.bf16.msra.mxu0 %v550
    %850 = vmatprep.subr.bf16.mxu0 %v555
    %851 = vmatpush1.bf16.msra.mxu0 %v554
    %852 = vmatprep.subr.bf16.mxu0 %v559
    %853 = vmatpush1.bf16.msra.mxu0 %v558
    %854 = vmatprep.subr.bf16.mxu0 %v563
    %855 = vmatpush1.bf16.msra.mxu0 %v562
    %856 = vmatprep.subr.bf16.mxu0 %v567
    %857 = vmatpush1.bf16.msra.mxu0 %v566
    %858 = vmatprep.subr.bf16.mxu0 %v571
    %859 = vmatpush1.bf16.msra.mxu0 %v570
    %860 = vmatprep.subr.bf16.mxu0 %v575
    %861 = vmatpush1.bf16.msra.mxu0 %v574
    %862 = vmatprep.subr.bf16.mxu0 %v579
    %863 = vmatpush1.bf16.msra.mxu0 %v578
    %864 = vmatprep.subr.bf16.mxu0 %v583
    %865 = vmatpush1.bf16.msra.mxu0 %v582
    %866 = vmatprep.subr.bf16.mxu0 %v713
    %867 = vmatpush1.bf16.msra.mxu0 %v710
    %868 = vmatprep.subr.bf16.mxu0 0
    %869 = vmatpush1.bf16.msra.mxu0 0
    %870 = vmatprep.subr.bf16.mxu0 0
    %871 = vmatpush1.bf16.msra.mxu0 0
    %872 = vmatprep.subr.bf16.mxu0 0
    %873 = vmatpush1.bf16.msra.mxu0 0
    %874 = vmatprep.subr.bf16.mxu0 0
    %875 = vmatpush1.bf16.msra.mxu0 0
    %876 = vmatprep.mubr.bf16.mxu0 %v698
    %877 = vmatmul.mubr.bf16.gmra.mrb[0].mxu0 %v141
    %v878 = vpop.f32.mrb[0].mxu0
    %v879 = vadd.f32 %v836, %v878
    %v880 = vpop.f32.mrb[0].mxu0
    %v881 = vadd.f32 %v838, %v880
    %v882 = vpop.f32.mrb[0].mxu0
    %v883 = vadd.f32 %v840, %v882
    %v884 = vpop.f32.mrb[0].mxu0
    %v885 = vadd.f32 %v842, %v884
    %886 = vdwg.mxu0
    %v887 = vpack.c.bf16 %v797, %v793
    %v888 = vpack.c.bf16 %v799, %v795
    %v889 = vpack.c.bf16 %v883, %v879
    %v890 = vpack.c.bf16 %v885, %v881
    %v895 = vunpack.c.l.b16 %v887
    %v896 = vunpack.c.l.b16 %v888
    %v897 = vunpack.c.l.b16 %v889
    %v898 = vunpack.c.l.b16 %v890
    %v899 = vunpack.c.h.b16 %v887
    %v900 = vunpack.c.h.b16 %v888
    %v901 = vunpack.c.h.b16 %v889
    %v902 = vunpack.c.h.b16 %v890
    %v903 = vpack.c.b16 %v896, %v895
    %v904 = vpack.c.b16 %v898, %v897
    %v905 = vpack.c.b16 %v900, %v899
    %v906 = vpack.c.b16 %v902, %v901
    %911 = vst [vmem:[#allocation2] sm:$0xff] %v903
    %vm912 = vcmask 1043456
    %vm913 = vcmask 130052
    %vm914 = vmor %vm913, %vm912
    %915 = vst.msk [vmem:[#allocation2 + $0x8] sm:$0xff] %vm914, %v904
    %916 = vst [vmem:[#allocation2 + $0x10] sm:$0xff] %v905
    %917 = vst.msk [vmem:[#allocation2 + $0x18] sm:$0xff] %vm914, %v906
    // Predicated region
    $region10: #{tpu_custom_call.1} parent=1 // pred_check
      _
    $region11: #{tpu_custom_call.1} parent=1 // pred_check_branch
      %919 = sbr.rel (0) target = $region13
    $region12: #{tpu_custom_call.1} parent=1 // pred_region
      %s921 = ssub.s32 512, 512
      %922 = vsyncadd [#allocation3], %s921
      %s923 = sshll.u32 [#allocation2], 4
      %s924 = int_to_ptr.vmem [resolvable:$true] %s923
      %929 = dma.vmem_to_hbm [thread:$0]  %s924, 512, %s2, [#allocation3], 256, 256, 16
    $region13: #{tpu_custom_call.1} parent=1 // pred_fallthru
      _
    // Predicated region
    $region14: #{tpu_custom_call.1} parent=1 // pred_check
      _
    $region15: #{tpu_custom_call.1} parent=1 // pred_check_branch
      %931 = sbr.rel (0) target = $region17
    $region16: #{tpu_custom_call.1} parent=1 // pred_region
      %932 = dma.done [#allocation3], 512
    $region17: #{tpu_custom_call.1} parent=1 // pred_fallthru
      _
    %933 = vsyncpa [#allocation3], 1

</llo_original>
